<compile_context>
chip_gen: v7x
topology: tpu7x:2x2x1
jax: 0.10.0
libtpu: 0.0.40
codegen_flags: <defaults>
</compile_context>

<pallas_src>
import functools
from collections import Counter

import jax
import jax.numpy as jnp
from jax.experimental import pallas as pl
from jax.experimental.pallas import tpu as pltpu

_NEG = -1e30  # finite "minus infinity" (avoids inf-inf NaNs in the online LSE)


def _debias_lse_kernel(logits_ref, logbias_ref, lse_ref, m_scr, l_scr, *, rem):
    """Streaming log-sum-exp of (logits + log_bias) over the class axis."""
    c_j = pl.program_id(1)
    c_last = pl.num_programs(1) - 1

    @pl.when(c_j == 0)
    def _init():
        m_scr[...] = jnp.full_like(m_scr, _NEG)
        l_scr[...] = jnp.zeros_like(l_scr)

    # (TN, TC) adjusted logits, computed in f32 regardless of input dtype.
    z = logits_ref[...].astype(jnp.float32) + logbias_ref[...].astype(jnp.float32)

    def _lse_update(zt):
        m_prev = m_scr[...]
        m_new = jnp.maximum(m_prev, jnp.max(zt, axis=-1, keepdims=True))
        alpha = jnp.exp(m_prev - m_new)
        l_scr[...] = alpha * l_scr[...] + jnp.sum(jnp.exp(zt - m_new),
                                                  axis=-1, keepdims=True)
        m_scr[...] = m_new

    if rem:
        # Padding mask only exists (and only runs) on the last class tile;
        # the compare uses a LOCAL iota vs. the static remainder — no
        # per-element global-offset add on any tile.
        @pl.when(c_j != c_last)
        def _full_tile():
            _lse_update(z)

        @pl.when(c_j == c_last)
        def _masked_tile():
            col = jax.lax.broadcasted_iota(jnp.int32, z.shape, 1)
            _lse_update(jnp.where(col < rem, z, _NEG))
    else:
        _lse_update(z)

    @pl.when(c_j == c_last)
    def _finalize():
        lse_ref[...] = m_scr[...] + jnp.log(l_scr[...])


def _vmem_capacity_bytes():
    try:
        info = pltpu.get_tpu_info()
        cap = getattr(info, "vmem_capacity_bytes", None)
        if cap:
            return int(cap)
    except Exception:
        pass
    return 64 * 1024 * 1024  # conservative (v7x-sized) fallback


def _choose_tiles(n, c, itemsize, tn=None, tc=None, *, big_vmem=False):
    # Class (lane) tile: multiple of 128, or the full class dim.
    max_tc = 4096 if big_vmem else 2048
    if tc is None:
        tc = c if c <= max_tc else max_tc
    if tc < c:
        tc = max(128, (tc // 128) * 128)      # enforce lane-tiling constraint
        tc = min(tc, max_tc)
    if tc >= c:
        tc = c                                 # full dim is always legal
    # Row (sublane) tile: per-logits-buffer budget sized per generation so the
    # double-buffered stream plus the f32 temporaries fit scoped VMEM.
    align = 8 if itemsize >= 4 else max(8, 32 // itemsize)  # 16 bf16, 32 i8
    budget = (8 if big_vmem else 4) * 1024 * 1024
    tn_cap = 1024 if big_vmem else 512
    if tn is None:
        tn = budget // max(1, tc * itemsize)
        tn = max(align, min(tn_cap, (tn // align) * align))
    tn = max(align, (tn // align) * align)
    if tn >= n:
        tn = n                                 # full dim is always legal
    return tn, tc


def debias_loss(logits, targets, class_bias, *, tn=None, tc=None):
    """logits: (N, C) any float dtype, targets: (N,) int, class_bias: (C,) f32."""
    n, c = logits.shape
    itemsize = jnp.dtype(logits.dtype).itemsize

    vmem_cap = _vmem_capacity_bytes()
    big_vmem = vmem_cap >= 96 * 1024 * 1024          # v5e / v6e (128 MiB parts)
    TN, TC = _choose_tiles(n, c, itemsize, tn, tc, big_vmem=big_vmem)
    n_tiles = pl.cdiv(n, TN)
    c_tiles = pl.cdiv(c, TC)
    rem = c % TC                                      # padded lanes in last tile

    log_bias = jnp.log(class_bias.astype(jnp.float32) + 1e-12)
    targets_i32 = targets.astype(jnp.int32)

    # VMEM estimate: double-buffered inputs + output + scratch + f32 compute
    # temporaries (z, exp) of the (TN, TC) tile.  Clamp to >= 32 MiB (at or
    # above every generation's scoped default) and <= 3/4 of physical VMEM.
    est = (2 * (TN * TC * itemsize + TC * 4)
           + 4 * TN * 4
           + 3 * TN * TC * 4)
    vmem_limit = int(min(3 * vmem_cap // 4, max(32 * 1024 * 1024, 2 * est)))

    kernel = functools.partial(_debias_lse_kernel, rem=rem)

    lse = pl.pallas_call(
        kernel,
        out_shape=jax.ShapeDtypeStruct((n, 1), jnp.float32),
        grid_spec=pltpu.PrefetchScalarGridSpec(
            num_scalar_prefetch=0,
            grid=(n_tiles, c_tiles),
            in_specs=[
                pl.BlockSpec((TN, TC), lambda i, j: (i, j)),  # logits (native dtype)
                pl.BlockSpec((1, TC), lambda i, j: (0, j)),   # log class bias
            ],
            out_specs=pl.BlockSpec((TN, 1), lambda i, j: (i, 0)),
            scratch_shapes=[pltpu.VMEM((TN, 1), jnp.float32)] * 2,  # m, l
        ),
        compiler_params=pltpu.CompilerParams(
            # Leading (row-tile) axis is parallel so v7x megacore can shard it;
            # class axis is the resident-output reduction axis.
            dimension_semantics=("parallel", "arbitrary"),
            vmem_limit_bytes=vmem_limit,
        ),
    )(logits, log_bias.reshape(1, c))

    # Target-class adjusted logit: O(N) gather done ONCE outside the streaming
    # loop (native-dtype gather, cast after), per the performance review.
    z_tgt = jnp.take_along_axis(logits, targets_i32[:, None], axis=1)[:, 0]
    z_tgt = z_tgt.astype(jnp.float32) + log_bias[targets_i32]

    # CE per example = LSE(adjusted) - adjusted[target]; mean reduction.
    return jnp.mean(lse[:, 0] - z_tgt)


def make_class_bias(labels):
    """class_bias[i] = len(labels) / (C * count(class i)), ordered by class id."""
    counter = Counter(labels)
    c = len(counter.keys())
    n = len(labels)
    bias = [n / (c * counter[i]) for i in sorted(counter.keys())]
    return jnp.array(bias, dtype=jnp.float32)


if __name__ == "__main__":
    key = jax.random.PRNGKey(0)
    N, C = 50, 300  # exercises partial row tile, partial class tile, online LSE

    # Deterministic synthetic "training labels" defining the class imbalance.
    labels = []
    for cls in range(C):
        labels.extend([cls] * (1 + (cls % 5)))
    class_bias = make_class_bias(labels)

    k1, k2 = jax.random.split(key)
    logits = jax.random.normal(k1, (N, C), dtype=jnp.float32).astype(jnp.bfloat16)
    targets = jax.random.randint(k2, (N,), 0, C, dtype=jnp.int32)

    # Small explicit tiles so the 2-D (row x class) streaming path is exercised.
    loss = debias_loss(logits, targets, class_bias, tn=16, tc=128)
    jax.block_until_ready(loss)

    # Pure-JAX reference (logit adjustment + mean cross-entropy), f32 math.
    adj = logits.astype(jnp.float32) + jnp.log(class_bias + 1e-12)[None, :]
    logp = jax.nn.log_softmax(adj, axis=-1)
    ref = -jnp.mean(logp[jnp.arange(N), targets])
    assert jnp.allclose(loss, ref, rtol=1e-4, atol=1e-4), (loss, ref)

    print("KERNEL_OK")
</pallas_src>

<mosaic_0001>
module attributes {stable_mosaic.version = 11 : i64} {
  func.func @_debias_lse_kernel(%arg0: i32, %arg1: i32, %arg2: memref<16x128xbf16, #tpu.memory_space<vmem>>, %arg3: memref<1x128xf32, #tpu.memory_space<vmem>>, %arg4: memref<16x1xf32, #tpu.memory_space<vmem>>, %arg5: memref<16x1xf32, #tpu.memory_space<vmem>>, %arg6: memref<16x1xf32, #tpu.memory_space<vmem>>) attributes {dimension_semantics = [#tpu.dimension_semantics<parallel>, #tpu.dimension_semantics<arbitrary>], iteration_bounds = array<i64: 4, 3>, scalar_prefetch = 0 : i64, scratch_operands = 2 : i64, tpu.core_type = #tpu.core_type<tc>, window_params = [{transform_indices = @transform_0, window_bounds = array<i64: 16, 128>}, {transform_indices = @transform_1, window_bounds = array<i64: 1, 128>}, {transform_indices = @transform_2, window_bounds = array<i64: 16, 1>}]} {
    %c0_i32 = arith.constant 0 : i32
    %0 = arith.cmpi eq, %arg1, %c0_i32 : i32
    %1 = arith.extui %0 : i1 to i32
    %c0_i32_0 = arith.constant 0 : i32
    %2 = arith.cmpi ne, %1, %c0_i32_0 : i32
    scf.if %2 {
      %cst = arith.constant -1.000000e+30 : f32
      %17 = vector.broadcast %cst : f32 to vector<16x1xf32>
      %c0_9 = arith.constant 0 : index
      %c0_10 = arith.constant 0 : index
      %18 = vector.load %arg5[%c0_9, %c0_10] : memref<16x1xf32, #tpu.memory_space<vmem>>, vector<16x1xf32>
      tpu.vector_store %arg5[%c0_9, %c0_10], %17 {strides = array<i32>} : memref<16x1xf32, #tpu.memory_space<vmem>>, vector<16x1xf32>,
      %cst_11 = arith.constant 0.000000e+00 : f32
      %19 = vector.broadcast %cst_11 : f32 to vector<16x1xf32>
      %c0_12 = arith.constant 0 : index
      %c0_13 = arith.constant 0 : index
      %20 = vector.load %arg6[%c0_12, %c0_13] : memref<16x1xf32, #tpu.memory_space<vmem>>, vector<16x1xf32>
      tpu.vector_store %arg6[%c0_12, %c0_13], %19 {strides = array<i32>} : memref<16x1xf32, #tpu.memory_space<vmem>>, vector<16x1xf32>,
    } else {
    }
    %c0 = arith.constant 0 : index
    %c0_1 = arith.constant 0 : index
    %3 = vector.load %arg2[%c0, %c0_1] : memref<16x128xbf16, #tpu.memory_space<vmem>>, vector<16x128xbf16>
    %4 = arith.extf %3 : vector<16x128xbf16> to vector<16x128xf32>
    %c0_2 = arith.constant 0 : index
    %c0_3 = arith.constant 0 : index
    %5 = vector.load %arg3[%c0_2, %c0_3] : memref<1x128xf32, #tpu.memory_space<vmem>>, vector<1x128xf32>
    %6 = vector.broadcast %5 : vector<1x128xf32> to vector<16x128xf32>
    %7 = arith.addf %4, %6 : vector<16x128xf32>
    %c2_i32 = arith.constant 2 : i32
    %8 = arith.cmpi ne, %arg1, %c2_i32 : i32
    %9 = arith.extui %8 : i1 to i32
    %c0_i32_4 = arith.constant 0 : i32
    %10 = arith.cmpi ne, %9, %c0_i32_4 : i32
    scf.if %10 {
      %c0_9 = arith.constant 0 : index
      %c0_10 = arith.constant 0 : index
      %17 = vector.load %arg5[%c0_9, %c0_10] : memref<16x1xf32, #tpu.memory_space<vmem>>, vector<16x1xf32>
      %cst = arith.constant dense<0xFF800000> : vector<16xf32>
      %18 = vector.multi_reduction <maximumf>, %7, %cst [1] : vector<16x128xf32> to vector<16xf32>
      %19 = vector.shape_cast %18 : vector<16xf32> to vector<16x1xf32>
      %20 = arith.maximumf %17, %19 : vector<16x1xf32>
      %21 = arith.subf %17, %20 : vector<16x1xf32>
      %22 = math.exp %21 : vector<16x1xf32>
      %c0_11 = arith.constant 0 : index
      %c0_12 = arith.constant 0 : index
      %23 = vector.load %arg6[%c0_11, %c0_12] : memref<16x1xf32, #tpu.memory_space<vmem>>, vector<16x1xf32>
      %24 = arith.mulf %22, %23 : vector<16x1xf32>
      %25 = vector.broadcast %20 : vector<16x1xf32> to vector<16x128xf32>
      %26 = arith.subf %7, %25 : vector<16x128xf32>
      %27 = math.exp %26 : vector<16x128xf32>
      %cst_13 = arith.constant dense<0.000000e+00> : vector<16xf32>
      %28 = vector.multi_reduction <add>, %27, %cst_13 [1] : vector<16x128xf32> to vector<16xf32>
      %29 = vector.shape_cast %28 : vector<16xf32> to vector<16x1xf32>
      %30 = arith.addf %24, %29 : vector<16x1xf32>
      %c0_14 = arith.constant 0 : index
      %c0_15 = arith.constant 0 : index
      %31 = vector.load %arg6[%c0_14, %c0_15] : memref<16x1xf32, #tpu.memory_space<vmem>>, vector<16x1xf32>
      tpu.vector_store %arg6[%c0_14, %c0_15], %30 {strides = array<i32>} : memref<16x1xf32, #tpu.memory_space<vmem>>, vector<16x1xf32>,
      %c0_16 = arith.constant 0 : index
      %c0_17 = arith.constant 0 : index
      %32 = vector.load %arg5[%c0_16, %c0_17] : memref<16x1xf32, #tpu.memory_space<vmem>>, vector<16x1xf32>
      tpu.vector_store %arg5[%c0_16, %c0_17], %20 {strides = array<i32>} : memref<16x1xf32, #tpu.memory_space<vmem>>, vector<16x1xf32>,
    } else {
    }
    %c2_i32_5 = arith.constant 2 : i32
    %11 = arith.cmpi eq, %arg1, %c2_i32_5 : i32
    %12 = arith.extui %11 : i1 to i32
    %c0_i32_6 = arith.constant 0 : i32
    %13 = arith.cmpi ne, %12, %c0_i32_6 : i32
    scf.if %13 {
      %17 = tpu.iota {dimensions = array<i32: 1>} : vector<16x128xi32>
      %c44_i32 = arith.constant 44 : i32
      %18 = vector.broadcast %c44_i32 : i32 to vector<16x128xi32>
      %19 = arith.cmpi slt, %17, %18 : vector<16x128xi32>
      %cst = arith.constant -1.000000e+30 : f32
      %20 = vector.broadcast %cst : f32 to vector<16x128xf32>
      %21 = arith.select %19, %7, %20 : vector<16x128xi1>, vector<16x128xf32>
      %c0_9 = arith.constant 0 : index
      %c0_10 = arith.constant 0 : index
      %22 = vector.load %arg5[%c0_9, %c0_10] : memref<16x1xf32, #tpu.memory_space<vmem>>, vector<16x1xf32>
      %cst_11 = arith.constant dense<0xFF800000> : vector<16xf32>
      %23 = vector.multi_reduction <maximumf>, %21, %cst_11 [1] : vector<16x128xf32> to vector<16xf32>
      %24 = vector.shape_cast %23 : vector<16xf32> to vector<16x1xf32>
      %25 = arith.maximumf %22, %24 : vector<16x1xf32>
      %26 = arith.subf %22, %25 : vector<16x1xf32>
      %27 = math.exp %26 : vector<16x1xf32>
      %c0_12 = arith.constant 0 : index
      %c0_13 = arith.constant 0 : index
      %28 = vector.load %arg6[%c0_12, %c0_13] : memref<16x1xf32, #tpu.memory_space<vmem>>, vector<16x1xf32>
      %29 = arith.mulf %27, %28 : vector<16x1xf32>
      %30 = vector.broadcast %25 : vector<16x1xf32> to vector<16x128xf32>
      %31 = arith.subf %21, %30 : vector<16x128xf32>
      %32 = math.exp %31 : vector<16x128xf32>
      %cst_14 = arith.constant dense<0.000000e+00> : vector<16xf32>
      %33 = vector.multi_reduction <add>, %32, %cst_14 [1] : vector<16x128xf32> to vector<16xf32>
      %34 = vector.shape_cast %33 : vector<16xf32> to vector<16x1xf32>
      %35 = arith.addf %29, %34 : vector<16x1xf32>
      %c0_15 = arith.constant 0 : index
      %c0_16 = arith.constant 0 : index
      %36 = vector.load %arg6[%c0_15, %c0_16] : memref<16x1xf32, #tpu.memory_space<vmem>>, vector<16x1xf32>
      tpu.vector_store %arg6[%c0_15, %c0_16], %35 {strides = array<i32>} : memref<16x1xf32, #tpu.memory_space<vmem>>, vector<16x1xf32>,
      %c0_17 = arith.constant 0 : index
      %c0_18 = arith.constant 0 : index
      %37 = vector.load %arg5[%c0_17, %c0_18] : memref<16x1xf32, #tpu.memory_space<vmem>>, vector<16x1xf32>
      tpu.vector_store %arg5[%c0_17, %c0_18], %25 {strides = array<i32>} : memref<16x1xf32, #tpu.memory_space<vmem>>, vector<16x1xf32>,
    } else {
    }
    %c2_i32_7 = arith.constant 2 : i32
    %14 = arith.cmpi eq, %arg1, %c2_i32_7 : i32
    %15 = arith.extui %14 : i1 to i32
    %c0_i32_8 = arith.constant 0 : i32
    %16 = arith.cmpi ne, %15, %c0_i32_8 : i32
    scf.if %16 {
      %c0_9 = arith.constant 0 : index
      %c0_10 = arith.constant 0 : index
      %17 = vector.load %arg5[%c0_9, %c0_10] : memref<16x1xf32, #tpu.memory_space<vmem>>, vector<16x1xf32>
      %c0_11 = arith.constant 0 : index
      %c0_12 = arith.constant 0 : index
      %18 = vector.load %arg6[%c0_11, %c0_12] : memref<16x1xf32, #tpu.memory_space<vmem>>, vector<16x1xf32>
      %19 = math.log %18 : vector<16x1xf32>
      %20 = arith.addf %17, %19 : vector<16x1xf32>
      %c0_13 = arith.constant 0 : index
      %c0_14 = arith.constant 0 : index
      %21 = vector.load %arg4[%c0_13, %c0_14] : memref<16x1xf32, #tpu.memory_space<vmem>>, vector<16x1xf32>
      tpu.vector_store %arg4[%c0_13, %c0_14], %20 {strides = array<i32>} : memref<16x1xf32, #tpu.memory_space<vmem>>, vector<16x1xf32>,
    } else {
    }
    return
  }
  func.func @transform_0(%arg0: i32, %arg1: i32) -> (i32, i32) {
    %c0_i32 = arith.constant 0 : i32
    return %arg0, %arg1 : i32, i32
  }
  func.func @transform_1(%arg0: i32, %arg1: i32) -> (i32, i32) {
    %c0_i32 = arith.constant 0 : i32
    %c0_i32_0 = arith.constant 0 : i32
    return %c0_i32, %arg1 : i32, i32
  }
  func.func @transform_2(%arg0: i32, %arg1: i32) -> (i32, i32) {
    %c0_i32 = arith.constant 0 : i32
    %c0_i32_0 = arith.constant 0 : i32
    return %arg0, %c0_i32 : i32, i32
  }
}

</mosaic_0001>

<llo_original>
// kernel: tpu_custom_call.1
$region0: #{tpu_custom_call.1}
  #allocation0 [shape = 'u32[]', space=smem, size = 0x4, offset = 0x4, fixed_abs, tag = 'smem constant byte address 0x4 - core index']
  #allocation1 [shape = 'u32[144,128]{1,0:T(1,128)}', space=vmem, size = 0x12000, scoped, tag = 'internal scratch']
  #allocation2 [shape = 'f32[16,1]{1,0:T(8,128)}', space=vmem, size = 0x2000, scoped, tag = 'scratch operand']
  #allocation3 [shape = 'f32[16,1]{1,0:T(8,128)}', space=vmem, size = 0x2000, scoped, tag = 'scratch operand']
  %s0 = inlined_call_operand.hbm [shape: bf16[50,300], index: 0, kind: input, shape index: {}]
  %s1 = inlined_call_operand.vmem [shape: f32[1,300], index: 1, kind: input, shape index: {}]
  %s2 = inlined_call_operand.vmem [shape: f32[50,1], index: 2, kind: output, shape index: {}]
  %s3 = sld [smem:[#allocation0]]
  $region105: #{tpu_custom_call.1} parent=0
    _
  %s5 = ssub.s32 1, %s3
  %s6 = scalar_select 0, %s5, %s3
  $region1: #{tpu_custom_call.1} parent=0
    #allocation4 [shape = 'u8[8192]{0}', space=vmem, size = 0x2000, scoped, tag = 'input window, operand 0']
    #allocation5 [shape = 's32[2]{0}', space=sflag, size = 0x8, scoped, tag = 'scoped memory for tpu_custom_call.1']
    #allocation6 [shape = 'u8[16384]{0}', space=vmem, size = 0x4000, scoped, tag = 'output window, operand 0']
    %7 = vsyncpa [#allocation5], 0
    %s8 = scalar_lea.sflag [#allocation5], 1
    %9 = vsyncpa %s8, 0
    loop: start=0, step=1, limit=14
    $region2: #{tpu_custom_call.1} parent=1 // loop_pre_header
      _
    $region3: #{tpu_custom_call.1} parent=1 // loop_header
      %s11 = sphi 0, %s15
      %p12 = scmp.ge.s32.totalorder %s11, 14
      %s18 = sphi 0, %s30
      %s19 = sphi 0, %s26
      %s20 = sphi 0, %s18
      %s21 = sphi 0, %s19
      %s22 = sphi 0, %s20
      %s23 = sphi 0, %s21
      %s35 = sphi 0, %s37
      %s38 = sphi 0, %s35
      %s39 = sphi 0, %s38
      %s55 = sphi 0, %s39
      %s61 = sphi 0, %s63
      %s64 = sphi 0, %s61
      %s65 = sphi 0, %s64
      %s81 = sphi 0, %s65
      %s87 = sphi 0, %s89
      %s90 = sphi 0, %s87
      %s91 = sphi 0, %s90
      %s107 = sphi 0, %s91
    $region4: #{tpu_custom_call.1} parent=1 // loop_header_branch
      %14 = sbr.rel (%p12) target = $region8
    $region5: #{tpu_custom_call.1} parent=1 // loop_body
      %s16 = ssub.s32 %s11, 1
      %s17 = ssub.s32 %s11, 2
      %s24 = sadd.s32 1, %s19
      %p25 = scmp.ge.s32.totalorder %s24, 3
      %s26 = scalar_select %p25, 0, %s24
      %s27 = sadd.s32 1, %s18
      %s28 = scalar_select %p25, %s27, %s18
      %p29 = scmp.ge.s32.totalorder %s28, 4
      %s30 = scalar_select %p29, 0, %s28
      %s31 = ssub.s32 %s18, %s30
      %s32 = ssub.s32 %s19, %s26
      %s33 = sor.u32 %s31, %s32
      %p34 = scmp.eq.s32.totalorder %s33, 0
      %s36 = sadd.s32 %s35, 1
      %s37 = scalar_select %p34, %s35, %s36
      %p40 = pneg %p34
      %p41 = scmp.eq.s32.totalorder %s11, 11
      %p42 = por %p40, %p41
      %p43 = scmp.ne.s32.totalorder %s35, %s38
      %p44 = scmp.eq.s32.totalorder %s11, 0
      %p45 = por %p43, %p44
      %p46 = scmp.ne.s32.totalorder %s35, %s38
      %p47 = scmp.eq.s32.totalorder %s16, 11
      %p48 = por %p46, %p47
      %p49 = scmp.ne.s32.totalorder %s38, %s39
      %p50 = scmp.eq.s32.totalorder %s16, 0
      %p51 = por %p49, %p50
      %p52 = scmp.ne.s32.totalorder %s38, %s39
      %p53 = scmp.eq.s32.totalorder %s17, 11
      %p54 = por %p52, %p53
      %p56 = scmp.ne.s32.totalorder %s39, %s55
      %p57 = scmp.eq.s32.totalorder %s17, 0
      %p58 = por %p56, %p57
      %s59 = ssub.s32 %s19, %s26
      %p60 = scmp.eq.s32.totalorder %s59, 0
      %s62 = sadd.s32 %s61, 1
      %s63 = scalar_select %p60, %s61, %s62
      %p66 = pneg %p60
      %p67 = scmp.eq.s32.totalorder %s11, 11
      %p68 = por %p66, %p67
      %p69 = scmp.ne.s32.totalorder %s61, %s64
      %p70 = scmp.eq.s32.totalorder %s11, 0
      %p71 = por %p69, %p70
      %p72 = scmp.ne.s32.totalorder %s61, %s64
      %p73 = scmp.eq.s32.totalorder %s16, 11
      %p74 = por %p72, %p73
      %p75 = scmp.ne.s32.totalorder %s64, %s65
      %p76 = scmp.eq.s32.totalorder %s16, 0
      %p77 = por %p75, %p76
      %p78 = scmp.ne.s32.totalorder %s64, %s65
      %p79 = scmp.eq.s32.totalorder %s17, 11
      %p80 = por %p78, %p79
      %p82 = scmp.ne.s32.totalorder %s65, %s81
      %p83 = scmp.eq.s32.totalorder %s17, 0
      %p84 = por %p82, %p83
      %s85 = ssub.s32 %s18, %s30
      %p86 = scmp.eq.s32.totalorder %s85, 0
      %s88 = sadd.s32 %s87, 1
      %s89 = scalar_select %p86, %s87, %s88
      %p92 = pneg %p86
      %p93 = scmp.eq.s32.totalorder %s11, 11
      %p94 = por %p92, %p93
      %p95 = scmp.ne.s32.totalorder %s87, %s90
      %p96 = scmp.eq.s32.totalorder %s11, 0
      %p97 = por %p95, %p96
      %p98 = scmp.ne.s32.totalorder %s87, %s90
      %p99 = scmp.eq.s32.totalorder %s16, 11
      %p100 = por %p98, %p99
      %p101 = scmp.ne.s32.totalorder %s90, %s91
      %p102 = scmp.eq.s32.totalorder %s16, 0
      %p103 = por %p101, %p102
      %p104 = scmp.ne.s32.totalorder %s90, %s91
      %p105 = scmp.eq.s32.totalorder %s17, 11
      %p106 = por %p104, %p105
      %p108 = scmp.ne.s32.totalorder %s91, %s107
      %p109 = scmp.eq.s32.totalorder %s17, 0
      %p110 = por %p108, %p109
      %p111 = scmp.le.s32.totalorder 1, %s11
      %p112 = scmp.lt.s32.totalorder %s11, 13
      %p113 = pnand %p111, %p112
      %p114 = pneg %p113
      // Predicated region
      $region9: #{tpu_custom_call.1} parent=5 // pred_check
        _
      $region10: #{tpu_custom_call.1} parent=5 // pred_check_branch
        %116 = sbr.rel (%p113) target = $region12
      $region11: #{tpu_custom_call.1} parent=5 // pred_region
        %s117 = ssub.s32 %s11, 1
      $region12: #{tpu_custom_call.1} parent=5 // pred_fallthru
        _
      %p118 = scmp.lt.s32.totalorder %s11, 12
      // Predicated region
      $region13: #{tpu_custom_call.1} parent=5 // pred_check
        %p119 = pneg %p118
      $region14: #{tpu_custom_call.1} parent=5 // pred_check_branch
        %121 = sbr.rel (%p119) target = $region16
      $region15: #{tpu_custom_call.1} parent=5 // pred_region
        // Predicated region
        $region17: #{tpu_custom_call.1} parent=15 // pred_check
          %p122 = pneg %p45
        $region18: #{tpu_custom_call.1} parent=15 // pred_check_branch
          %124 = sbr.rel (%p122) target = $region20
        $region19: #{tpu_custom_call.1} parent=15 // pred_region
          %s125 = sand.u32 %s35, 1
          %s126 = scalar_lea.sflag [#allocation5], %s125
          %s127 = sand.u32 %s35, 1
          %s128 = smul.addr %s127, 8
          %s129 = scalar_lea.vmem [#allocation4], %s128
          %s130 = smul.u32 2, %s18
          %s131 = ssub.s32 7, %s130
          %p132 = scmp.lt.s32.totalorder %s131, 2
          %s133 = scalar_select %p132, %s131, 2
          %s134 = smul.u32 64, %s133
          %s136 = ssub.s32 128, %s134
          %137 = vsyncadd %s126, %s136
          %p138 = scmp.ne.s32.totalorder 0, %s134
          %s139 = smul.addr %s130, 3
          %s140 = sadd.s32 %s19, %s139
          %s141 = smul.addr %s140, 64
          %s142 = scalar_lea.hbm %s0, %s141
          %s143 = smul.u32 4, %s133
          %s144 = sshll.u32 %s129, 4
          %s145 = int_to_ptr.vmem [resolvable:$true] %s144
          %s146 = sshll.u32 %s143, 4
          %150 = dma.hbm_to_vmem [thread:$0]  (%p138), %s142, %s146, %s145, %s126, 192, 64, 4
        $region20: #{tpu_custom_call.1} parent=15 // pred_fallthru
          _
        // Predicated region
        $region21: #{tpu_custom_call.1} parent=15 // pred_check
          %p151 = pneg %p71
        $region22: #{tpu_custom_call.1} parent=15 // pred_check_branch
          %153 = sbr.rel (%p151) target = $region24
        $region23: #{tpu_custom_call.1} parent=15 // pred_region
          %p154 = scmp.lt.s32.totalorder %s19, 2
          %s155 = scalar_select %p154, %s19, 2
          %s156 = scalar_lea.vmem %s1, %s155
        $region24: #{tpu_custom_call.1} parent=15 // pred_fallthru
          _
      $region16: #{tpu_custom_call.1} parent=5 // pred_fallthru
        _
      %p157 = scmp.le.s32.totalorder 1, %s11
      %p158 = scmp.lt.s32.totalorder %s11, 13
      %p159 = pnand %p157, %p158
      %p160 = pneg %p159
      // Predicated region
      $region25: #{tpu_custom_call.1} parent=5 // pred_check
        _
      $region26: #{tpu_custom_call.1} parent=5 // pred_check_branch
        %162 = sbr.rel (%p159) target = $region28
      $region27: #{tpu_custom_call.1} parent=5 // pred_region
        %s163 = ssub.s32 %s11, 1
        %s164 = sand.u32 %s38, 1
        %s165 = scalar_lea.sflag [#allocation5], %s164
        %s166 = sand.u32 %s38, 1
        %s167 = smul.addr %s166, 8
        %s168 = scalar_lea.vmem [#allocation4], %s167
        // Predicated region
        $region29: #{tpu_custom_call.1} parent=27 // pred_check
          %p169 = pneg %p51
        $region30: #{tpu_custom_call.1} parent=27 // pred_check_branch
          %171 = sbr.rel (%p169) target = $region32
        $region31: #{tpu_custom_call.1} parent=27 // pred_region
          %172 = dma.done %s165, 128
        $region32: #{tpu_custom_call.1} parent=27 // pred_fallthru
          _
        %s173 = sand.u32 %s38, 1
        %s174 = scalar_lea.sflag [#allocation5], %s173
        %s175 = sand.u32 %s38, 1
        %s176 = smul.addr %s175, 8
        %s177 = scalar_lea.vmem [#allocation4], %s176
        %p178 = pneg %p51
        %p179 = pneg %p48
        %p180 = scmp.lt.s32.totalorder %s21, 2
        %s181 = scalar_select %p180, %s21, 2
        %s182 = scalar_lea.vmem %s1, %s181
        %p183 = pneg %p77
        %p184 = pneg %p74
        %p185 = pneg %p103
        %p186 = pneg %p100
        %s187 = sand.u32 %s90, 1
        %s188 = sand.u32 %s90, 1
        %s189 = smul.addr %s188, 16
        %s190 = scalar_lea.vmem [#allocation6], %s189
        %s191 = smul.u32 2, %s20
        %s192 = ssub.s32 7, %s191
        %p193 = scmp.lt.s32.totalorder %s192, 2
        %s194 = scalar_select %p193, %s192, 2
        %s195 = smul.u32 64, %s194
        %p196 = scmp.lt.s32.totalorder %s21, 2
        %s197 = scalar_select %p196, %s21, 2
        %s198 = scalar_lea.vmem %s1, %s197
        %s199 = smul.u32 2, %s20
        %s200 = ssub.s32 7, %s199
        %p201 = scmp.lt.s32.totalorder %s200, 2
        %s202 = scalar_select %p201, %s200, 2
        %s203 = smul.u32 128, %s202
        %p204 = scmp.eq.s32.totalorder %s21, 0
        // Predicated region
        $region33: #{tpu_custom_call.1} parent=27 // pred_check
          %p205 = pneg %p204
        $region34: #{tpu_custom_call.1} parent=27 // pred_check_branch
          %207 = sbr.rel (%p205) target = $region36
        $region35: #{tpu_custom_call.1} parent=27 // pred_region
          %vm208 = vcmask 7168
          %209 = vst.msk [vmem:[#allocation2] sm:$0xff] %vm208, -1e+30
          %210 = vst.msk [vmem:[#allocation2 + $0x8] sm:$0xff] %vm208, -1e+30
          %211 = vst.msk [vmem:[#allocation3] sm:$0xff] %vm208, 0.0
          %212 = vst.msk [vmem:[#allocation3 + $0x8] sm:$0xff] %vm208, 0.0
        $region36: #{tpu_custom_call.1} parent=27 // pred_fallthru
          _
        %v213 = vld [vmem:[%s168] sm:$0xf]
        %v214 = vld [vmem:[%s168 + $0x4] sm:$0xf]
        %v215 = vunpack.c.l.bf16 %v213
        %v216 = vunpack.c.l.bf16 %v214
        %v217 = vld [vmem:[%s198] sm:$0x1]
        %v219 = vlaneseq
        %v220 = vshrl.u32 %v219, 7
        %v221 = vsub.s32 0, %v220
        %v222 = vrot.slane %v217, %v221
        %v224 = vadd.f32 %v215, %v222
        %v225 = vadd.f32 %v216, %v222
        %p226 = scmp.ne.s32.totalorder %s21, 2
        // Predicated region
        $region37: #{tpu_custom_call.1} parent=27 // pred_check
          %p227 = pneg %p226
        $region38: #{tpu_custom_call.1} parent=27 // pred_check_branch
          %229 = sbr.rel (%p227) target = $region40
        $region39: #{tpu_custom_call.1} parent=27 // pred_region
          %v230 = vld [vmem:[#allocation2] sm:$0xff]
          %v231 = vld [vmem:[#allocation2 + $0x8] sm:$0xff]
          %232 = vmax.xlane.f32.xlu0 %v224
          %v233 = vpop.xlane.xlu0 %232
          %234 = vmax.xlane.f32.xlu0 %v225
          %v235 = vpop.xlane.xlu0 %234
          %v236 = vmax.f32 %v230, %v233
          %v237 = vmax.f32 %v231, %v235
          %v238 = vsub.f32 %v230, %v236
          %v239 = vsub.f32 %v231, %v237
          %v240 = vmul.f32 %v238, 1.442695
          %v241 = vpow.pop %v240
          %v242 = vmul.f32 %v239, 1.442695
          %v243 = vpow.pop %v242
          %v244 = vld [vmem:[#allocation3] sm:$0xff]
          %v245 = vld [vmem:[#allocation3 + $0x8] sm:$0xff]
          %v246 = vmul.f32 %v241, %v244
          %v247 = vmul.f32 %v243, %v245
          %249 = vset.pattern.permute.xlu0 0
          %250 = vperm.xlu0 %249, %v236
          %v251 = vpop.permute.xlu0 %250
          %254 = vset.pattern.permute.xlu0 0
          %255 = vperm.xlu0 %254, %v237
          %v256 = vpop.permute.xlu0 %255
          %v258 = vsub.f32 %v224, %v251
          %v259 = vsub.f32 %v225, %v256
          %v260 = vmul.f32 %v258, 1.442695
          %v261 = vpow.pop %v260
          %v262 = vmul.f32 %v259, 1.442695
          %v263 = vpow.pop %v262
          %264 = vadd.xlane.f32.xlu0 %v261
          %v265 = vpop.xlane.xlu0 %264
          %266 = vadd.xlane.f32.xlu0 %v263
          %v267 = vpop.xlane.xlu0 %266
          %v268 = vadd.f32 %v246, %v265
          %v269 = vadd.f32 %v247, %v267
          %vm270 = vcmask 7168
          %271 = vst.msk [vmem:[#allocation3] sm:$0xff] %vm270, %v268
          %272 = vst.msk [vmem:[#allocation3 + $0x8] sm:$0xff] %vm270, %v269
          %273 = vst.msk [vmem:[#allocation2] sm:$0xff] %vm270, %v236
          %274 = vst.msk [vmem:[#allocation2 + $0x8] sm:$0xff] %vm270, %v237
        $region40: #{tpu_custom_call.1} parent=27 // pred_fallthru
          _
        %p275 = scmp.eq.s32.totalorder %s21, 2
        // Predicated region
        $region41: #{tpu_custom_call.1} parent=27 // pred_check
          %p276 = pneg %p275
        $region42: #{tpu_custom_call.1} parent=27 // pred_check_branch
          %278 = sbr.rel (%p276) target = $region44
        $region43: #{tpu_custom_call.1} parent=27 // pred_region
          %v279 = vlaneseq
          %v280 = vand.u32 %v279, 127
          %vm281 = vcmp.lt.s32.totalorder %v280, 44
          %v282 = vsel %vm281, %v224, -1e+30
          %v283 = vsel %vm281, %v225, -1e+30
          %v284 = vld [vmem:[#allocation2] sm:$0xff]
          %v285 = vld [vmem:[#allocation2 + $0x8] sm:$0xff]
          %286 = vmax.xlane.f32.xlu0 %v282
          %v287 = vpop.xlane.xlu0 %286
          %288 = vmax.xlane.f32.xlu0 %v283
          %v289 = vpop.xlane.xlu0 %288
          %v290 = vmax.f32 %v284, %v287
          %v291 = vmax.f32 %v285, %v289
          %v292 = vsub.f32 %v284, %v290
          %v293 = vsub.f32 %v285, %v291
          %v294 = vmul.f32 %v292, 1.442695
          %v295 = vpow.pop %v294
          %v296 = vmul.f32 %v293, 1.442695
          %v297 = vpow.pop %v296
          %v298 = vld [vmem:[#allocation3] sm:$0xff]
          %v299 = vld [vmem:[#allocation3 + $0x8] sm:$0xff]
          %v300 = vmul.f32 %v295, %v298
          %v301 = vmul.f32 %v297, %v299
          %303 = vset.pattern.permute.xlu0 0
          %304 = vperm.xlu0 %303, %v290
          %v305 = vpop.permute.xlu0 %304
          %308 = vset.pattern.permute.xlu0 0
          %309 = vperm.xlu0 %308, %v291
          %v310 = vpop.permute.xlu0 %309
          %v312 = vsub.f32 %v282, %v305
          %v313 = vsub.f32 %v283, %v310
          %v314 = vmul.f32 %v312, 1.442695
          %v315 = vpow.pop %v314
          %v316 = vmul.f32 %v313, 1.442695
          %v317 = vpow.pop %v316
          %318 = vadd.xlane.f32.xlu0 %v315
          %v319 = vpop.xlane.xlu0 %318
          %320 = vadd.xlane.f32.xlu0 %v317
          %v321 = vpop.xlane.xlu0 %320
          %v322 = vadd.f32 %v300, %v319
          %v323 = vadd.f32 %v301, %v321
          %vm324 = vcmask 7168
          %325 = vst.msk [vmem:[#allocation3] sm:$0xff] %vm324, %v322
          %326 = vst.msk [vmem:[#allocation3 + $0x8] sm:$0xff] %vm324, %v323
          %327 = vst.msk [vmem:[#allocation2] sm:$0xff] %vm324, %v290
          %328 = vst.msk [vmem:[#allocation2 + $0x8] sm:$0xff] %vm324, %v291
          %v329 = vld [vmem:[#allocation2] sm:$0xff]
          %v330 = vld [vmem:[#allocation2 + $0x8] sm:$0xff]
          %v331 = vld [vmem:[#allocation3] sm:$0xff]
          %v332 = vld [vmem:[#allocation3 + $0x8] sm:$0xff]
          %v333 = vlog2.pop %v331
          %v334 = vmul.f32 %v333, 0.6931472
          %v335 = vlog2.pop %v332
          %v336 = vmul.f32 %v335, 0.6931472
          %v337 = vadd.f32 %v329, %v334
          %v338 = vadd.f32 %v330, %v336
          %339 = vst.msk [vmem:[%s190] sm:$0xff] %vm324, %v337
          %340 = vst.msk [vmem:[%s190 + $0x8] sm:$0xff] %vm324, %v338
        $region44: #{tpu_custom_call.1} parent=27 // pred_fallthru
          _
        %s341 = sand.u32 %s90, 1
        %s342 = sand.u32 %s90, 1
        %s343 = smul.addr %s342, 16
        %s344 = scalar_lea.vmem [#allocation6], %s343
        // Predicated region
        $region45: #{tpu_custom_call.1} parent=27 // pred_check
          %p345 = pneg %p100
        $region46: #{tpu_custom_call.1} parent=27 // pred_check_branch
          %347 = sbr.rel (%p345) target = $region48
        $region47: #{tpu_custom_call.1} parent=27 // pred_region
          %s348 = smul.u32 2, %s20
          %s349 = ssub.s32 7, %s348
          %p350 = scmp.lt.s32.totalorder %s349, 2
          %s351 = scalar_select %p350, %s349, 2
          %s352 = smul.u32 128, %s351
          %p353 = scmp.ne.s32.totalorder 0, %s352
          %s354 = smul.addr %s348, 8
          %s355 = scalar_lea.vmem %s2, %s354
          // Predicated region
          $region49: #{tpu_custom_call.1} parent=47 // pred_check
            %p356 = pneg %p353
          $region50: #{tpu_custom_call.1} parent=47 // pred_check_branch
            %358 = sbr.rel (%p356) target = $region52
          $region51: #{tpu_custom_call.1} parent=47 // pred_region
            // Predicated region
            $region53: #{tpu_custom_call.1} parent=51 // pred_check
              _
            $region54: #{tpu_custom_call.1} parent=51 // pred_check_branch
              %360 = sbr.rel (0) target = $region56
            $region55: #{tpu_custom_call.1} parent=51 // pred_region
              // Predicated region
              $region75: #{tpu_custom_call.1} parent=55 // pred_check
                _
              $region76: #{tpu_custom_call.1} parent=55 // pred_check_branch
                %411 = sbr.rel (0) target = $region78
              $region77: #{tpu_custom_call.1} parent=55 // pred_region
                %s412 = sshrl.u32 %s351, 1
                // While loop
                $region79: #{tpu_custom_call.1} parent=77 // loop_pre_header
                  _
                $region80: #{tpu_custom_call.1} parent=77 // loop_header
                  %s414 = sphi 0, %s416
                  %p415 = scmp.ge.s32.totalorder %s414, %s412
                  %s419 = sphi 0, %s428
                  %s420 = sphi %s344, %s431
                  %s421 = sphi %s355, %s432
                $region81: #{tpu_custom_call.1} parent=77 // loop_header_branch
                  %418 = sbr.rel (%p415) target = $region85
                $region82: #{tpu_custom_call.1} parent=77 // loop_body
                  %v422 = vld [vmem:[%s420] sm:$0xff]
                  %423 = vst [vmem:[%s421] sm:$0xff] %v422
                  %v424 = vld [vmem:[%s420 + $0x8] sm:$0xff]
                  %425 = vst [vmem:[%s421 + $0x8] sm:$0xff] %v424
                  %s426 = sadd.s32 1, %s419
                  %p427 = scmp.ge.s32.totalorder %s426, %s412
                  %s428 = scalar_select %p427, 0, %s426
                  %s429 = smul.u32 %s428, 16
                  %s430 = smul.u32 %s428, 16
                  %s431 = scalar_lea.vmem %s344, %s429 [#allocation6]
                  %s432 = scalar_lea.vmem %s355, %s430
                $region83: #{tpu_custom_call.1} parent=77 // loop_footer
                  %s416 = sadd.s32 %s414, 1
                $region84: #{tpu_custom_call.1} parent=77 // loop_footer_branch
                  %413 = sbr.rel target = $region80
                $region85: #{tpu_custom_call.1} parent=77 // loop_exit
                  _
                %s433 = sshrl.u32 %s351, 1
                %s434 = sand.u32 %s351, 1
                %s435 = smul.u32 %s433, 2
                %s436 = smul.u32 8, %s435
                %s437 = scalar_lea.vmem %s344, %s436 [#allocation6]
                %s438 = smul.u32 8, %s435
                %s439 = scalar_lea.vmem %s355, %s438
                // While loop
                $region86: #{tpu_custom_call.1} parent=77 // loop_pre_header
                  _
                $region87: #{tpu_custom_call.1} parent=77 // loop_header
                  %s441 = sphi 0, %s443
                  %p442 = scmp.ge.s32.totalorder %s441, %s434
                  %s446 = sphi 0, %s453
                  %s447 = sphi %s437, %s456
                  %s448 = sphi %s439, %s457
                $region88: #{tpu_custom_call.1} parent=77 // loop_header_branch
                  %445 = sbr.rel (%p442) target = $region92
                $region89: #{tpu_custom_call.1} parent=77 // loop_body
                  %v449 = vld [vmem:[%s447] sm:$0xff]
                  %450 = vst [vmem:[%s448] sm:$0xff] %v449
                  %s451 = sadd.s32 1, %s446
                  %p452 = scmp.ge.s32.totalorder %s451, %s434
                  %s453 = scalar_select %p452, 0, %s451
                  %s454 = smul.u32 %s453, 8
                  %s455 = smul.u32 %s453, 8
                  %s456 = scalar_lea.vmem %s437, %s454 [#allocation6]
                  %s457 = scalar_lea.vmem %s439, %s455
                $region90: #{tpu_custom_call.1} parent=77 // loop_footer
                  %s443 = sadd.s32 %s441, 1
                $region91: #{tpu_custom_call.1} parent=77 // loop_footer_branch
                  %440 = sbr.rel target = $region87
                $region92: #{tpu_custom_call.1} parent=77 // loop_exit
                  _
              $region78: #{tpu_custom_call.1} parent=55 // pred_fallthru
                _
              // Predicated region
              $region93: #{tpu_custom_call.1} parent=55 // pred_check
                _
              $region94: #{tpu_custom_call.1} parent=55 // pred_check_branch
                %459 = sbr.rel target = $region96
              $region95: #{tpu_custom_call.1} parent=55 // pred_region
                _
              $region96: #{tpu_custom_call.1} parent=55 // pred_fallthru
                _
            $region56: #{tpu_custom_call.1} parent=51 // pred_fallthru
              _
            // Predicated region
            $region57: #{tpu_custom_call.1} parent=51 // pred_check
              _
            $region58: #{tpu_custom_call.1} parent=51 // pred_check_branch
              %362 = sbr.rel target = $region60
            $region59: #{tpu_custom_call.1} parent=51 // pred_region
              %s364 = sshrl.u32 %s351, 1
              // While loop
              $region61: #{tpu_custom_call.1} parent=59 // loop_pre_header
                _
              $region62: #{tpu_custom_call.1} parent=59 // loop_header
                %s366 = sphi 0, %s368
                %p367 = scmp.ge.s32.totalorder %s366, %s364
                %s371 = sphi 0, %s380
                %s372 = sphi %s344, %s383
                %s373 = sphi %s355, %s384
              $region63: #{tpu_custom_call.1} parent=59 // loop_header_branch
                %370 = sbr.rel (%p367) target = $region67
              $region64: #{tpu_custom_call.1} parent=59 // loop_body
                %v374 = vld [vmem:[%s372] sm:$0xff]
                %375 = vst [vmem:[%s373] sm:$0xff] %v374
                %v376 = vld [vmem:[%s372 + $0x8] sm:$0xff]
                %377 = vst [vmem:[%s373 + $0x8] sm:$0xff] %v376
                %s378 = sadd.s32 1, %s371
                %p379 = scmp.ge.s32.totalorder %s378, %s364
                %s380 = scalar_select %p379, 0, %s378
                %s381 = smul.u32 %s380, 16
                %s382 = smul.u32 %s380, 16
                %s383 = scalar_lea.vmem %s344, %s381 [#allocation6]
                %s384 = scalar_lea.vmem %s355, %s382
              $region65: #{tpu_custom_call.1} parent=59 // loop_footer
                %s368 = sadd.s32 %s366, 1
              $region66: #{tpu_custom_call.1} parent=59 // loop_footer_branch
                %365 = sbr.rel target = $region62
              $region67: #{tpu_custom_call.1} parent=59 // loop_exit
                _
              %s385 = sshrl.u32 %s351, 1
              %s386 = sand.u32 %s351, 1
              %s387 = smul.u32 %s385, 2
              %s388 = smul.u32 8, %s387
              %s389 = scalar_lea.vmem %s344, %s388 [#allocation6]
              %s390 = smul.u32 8, %s387
              %s391 = scalar_lea.vmem %s355, %s390
              // While loop
              $region68: #{tpu_custom_call.1} parent=59 // loop_pre_header
                _
              $region69: #{tpu_custom_call.1} parent=59 // loop_header
                %s393 = sphi 0, %s395
                %p394 = scmp.ge.s32.totalorder %s393, %s386
                %s398 = sphi 0, %s405
                %s399 = sphi %s389, %s408
                %s400 = sphi %s391, %s409
              $region70: #{tpu_custom_call.1} parent=59 // loop_header_branch
                %397 = sbr.rel (%p394) target = $region74
              $region71: #{tpu_custom_call.1} parent=59 // loop_body
                %v401 = vld [vmem:[%s399] sm:$0xff]
                %402 = vst [vmem:[%s400] sm:$0xff] %v401
                %s403 = sadd.s32 1, %s398
                %p404 = scmp.ge.s32.totalorder %s403, %s386
                %s405 = scalar_select %p404, 0, %s403
                %s406 = smul.u32 %s405, 8
                %s407 = smul.u32 %s405, 8
                %s408 = scalar_lea.vmem %s389, %s406 [#allocation6]
                %s409 = scalar_lea.vmem %s391, %s407
              $region72: #{tpu_custom_call.1} parent=59 // loop_footer
                %s395 = sadd.s32 %s393, 1
              $region73: #{tpu_custom_call.1} parent=59 // loop_footer_branch
                %392 = sbr.rel target = $region69
              $region74: #{tpu_custom_call.1} parent=59 // loop_exit
                _
            $region60: #{tpu_custom_call.1} parent=51 // pred_fallthru
              _
          $region52: #{tpu_custom_call.1} parent=47 // pred_fallthru
            _
          %460 = vnop
        $region48: #{tpu_custom_call.1} parent=27 // pred_fallthru
          _
      $region28: #{tpu_custom_call.1} parent=5 // pred_fallthru
        _
      %p461 = scmp.le.s32.totalorder 2, %s11
      // Predicated region
      $region97: #{tpu_custom_call.1} parent=5 // pred_check
        %p462 = pneg %p461
      $region98: #{tpu_custom_call.1} parent=5 // pred_check_branch
        %464 = sbr.rel (%p462) target = $region100
      $region99: #{tpu_custom_call.1} parent=5 // pred_region
        %s465 = ssub.s32 %s11, 2
        // Predicated region
        $region101: #{tpu_custom_call.1} parent=99 // pred_check
          %p466 = pneg %p106
        $region102: #{tpu_custom_call.1} parent=99 // pred_check_branch
          %468 = sbr.rel (%p466) target = $region104
        $region103: #{tpu_custom_call.1} parent=99 // pred_region
          %s469 = sand.u32 %s91, 1
          %s470 = sand.u32 %s91, 1
          %s471 = smul.addr %s470, 16
          %s472 = scalar_lea.vmem [#allocation6], %s471
        $region104: #{tpu_custom_call.1} parent=99 // pred_fallthru
          _
      $region100: #{tpu_custom_call.1} parent=5 // pred_fallthru
        _
    $region6: #{tpu_custom_call.1} parent=1 // loop_footer
      %s15 = sadd.s32 1, %s11
    $region7: #{tpu_custom_call.1} parent=1 // loop_footer_branch
      %10 = sbr.rel target = $region3
    $region8: #{tpu_custom_call.1} parent=1 // loop_exit
      _
    %473 = vsyncpa [#allocation5], 1
    %s474 = scalar_lea.sflag [#allocation5], 1
    %475 = vsyncpa %s474, 1

</llo_original>
